<compile_context>
chip_gen: v6e
topology: v6e:2x2x1
jax: 0.10.0
libtpu: 0.0.40
codegen_flags: <defaults>
</compile_context>

<pallas_src>
import functools

import jax
import jax.numpy as jnp
from jax.experimental import pallas as pl
from jax.experimental.pallas import tpu as pltpu


def attention_kernel(hidden_ref, mbias_ref, ctx_ref,
                     w_h2s_ref, b_h2s_ref,
                     w_s2s_ref, b_s2s_ref,
                     w_a2o_ref, b_a2o_ref,
                     out_ref, *, seq_len):
    rows, C = ctx_ref.shape                     # rows = TB * S
    TB = rows // seq_len
    A = w_s2s_ref.shape[1]

    ctx2d = ctx_ref[...]                        # (TB*S, C)  bf16

    # s2s(context): (TB*S, C) @ (C, A) on the MXU, f32 accumulation.
    s2s = jnp.dot(ctx2d, w_s2s_ref[...],
                  preferred_element_type=jnp.float32) + b_s2s_ref[...]
    # h2s(hidden): (TB, H) @ (H, A) on the MXU.
    h2s = jnp.dot(hidden_ref[...], w_h2s_ref[...],
                  preferred_element_type=jnp.float32) + b_h2s_ref[...]

    # attn_h = s2s + h2s broadcast over the sequence axis; tanh in f32 (EUP).
    attn_h = s2s.reshape(TB, seq_len, A) + h2s[:, None, :]   # (TB, S, A) f32
    t = jnp.tanh(attn_h)

    # a2o on the MXU: (TB*S, A) @ (A, 1) -> (TB*S, 1) logits.
    t_lp = t.astype(w_a2o_ref.dtype)
    logit = jnp.dot(t_lp.reshape(rows, A), w_a2o_ref[...],
                    preferred_element_type=jnp.float32)
    logit = logit.reshape(TB, seq_len, 1) + b_a2o_ref[0, 0]  # (TB, S, 1) f32

    # masked_fill_ as a precomputed additive bias (0 or -1e30) -> single VPU add.
    logit = logit + mbias_ref[...]

    # Softmax over the sequence (sublane) axis, f32.
    m = jnp.max(logit, axis=1, keepdims=True)
    e = jnp.exp(logit - m)
    denom = jnp.sum(e, axis=1, keepdims=True)
    probs = e * pl.reciprocal(denom, approx=False)   # approx=True = perf knob

    # output[b, c] = sum_s probs[b, s] * context[b, s, c]
    # (VPU multiply + sublane reduce; S is small, so skip the MXU here.)
    ctx3d = ctx2d.reshape(TB, seq_len, C).astype(jnp.float32)
    out_ref[...] = jnp.sum(probs * ctx3d, axis=1).astype(out_ref.dtype)


def attention_forward(hidden, mask, context, params, *, batch_tile=None,
                      stream_dtype=jnp.bfloat16):
    """hidden (B, H) f32, mask (B, S) {0.,1.}, context (B, S, C) f32."""
    B, S, C = context.shape
    H = hidden.shape[1]
    A = params["w_s2s"].shape[1]

    if batch_tile is None:
        batch_tile = B
        for cand in (64, 32, 16, 8):        # biggest sublane-aligned divisor
            if B % cand == 0:
                batch_tile = cand
                break
    TB = batch_tile
    assert B % TB == 0, "batch_tile must divide the batch"
    # TODO(synk): tile the sequence axis (two-pass / online softmax) for very
    # long S so the (TB, S, A) tanh intermediate never lives in VMEM at once.

    # Layout / dtype plumbing done once in XLA (free for the kernel):
    ctx2d = context.reshape(B * S, C).astype(stream_dtype)
    hidden_lp = hidden.astype(stream_dtype)
    w_h2s = params["w_h2s"].astype(stream_dtype)
    w_s2s = params["w_s2s"].astype(stream_dtype)
    w_a2o = params["w_a2o"].astype(stream_dtype)        # (A, 1)

    # Hoist the `mask.any()` gate; additive bias instead of where(..., -inf).
    # Note: a fully-masked row yields uniform probs here (PyTorch gives NaN).
    any_mask = jnp.any(mask != 0.0)
    mask_bias = jnp.where(jnp.logical_and(any_mask, mask != 1.0),
                          jnp.float32(-1e30), jnp.float32(0.0))[..., None]  # (B,S,1)

    kernel = functools.partial(attention_kernel, seq_len=S)

    grid_spec = pltpu.PrefetchScalarGridSpec(
        num_scalar_prefetch=0,
        grid=(B // TB,),
        in_specs=[
            pl.BlockSpec((TB, H), lambda b: (b, 0)),            # hidden tile
            pl.BlockSpec((TB, S, 1), lambda b: (b, 0, 0)),      # mask bias tile
            pl.BlockSpec((TB * S, C), lambda b: (b, 0)),        # flattened context
            pl.BlockSpec((H, A), lambda b: (0, 0)),             # w_h2s (resident)
            pl.BlockSpec((1, A), lambda b: (0, 0)),             # b_h2s
            pl.BlockSpec((C, A), lambda b: (0, 0)),             # w_s2s (resident)
            pl.BlockSpec((1, A), lambda b: (0, 0)),             # b_s2s
            pl.BlockSpec((A, 1), lambda b: (0, 0)),             # w_a2o (resident)
            pl.BlockSpec((1, 1), lambda b: (0, 0),
                         memory_space=pltpu.MemorySpace.SMEM),  # b_a2o scalar
        ],
        out_specs=pl.BlockSpec((TB, C), lambda b: (b, 0)),
    )

    return pl.pallas_call(
        kernel,
        out_shape=jax.ShapeDtypeStruct((B, C), jnp.float32),
        grid_spec=grid_spec,
        compiler_params=pltpu.CompilerParams(
            dimension_semantics=("parallel",)),
    )(hidden_lp, mask_bias, ctx2d,
      w_h2s, params["b_h2s"], w_s2s, params["b_s2s"],
      w_a2o, params["b_a2o"])


def init_params(key, nhid, ncontext, natt):
    k1, k2, k3, k4, k5, k6 = jax.random.split(key, 6)
    scale = 0.1
    return {
        # nn.Linear(nhid, natt): stored transposed (nhid, natt)
        "w_h2s": scale * jax.random.normal(k1, (nhid, natt), jnp.float32),
        "b_h2s": scale * jax.random.normal(k2, (1, natt), jnp.float32),
        # nn.Linear(ncontext, natt): stored transposed (ncontext, natt)
        "w_s2s": scale * jax.random.normal(k3, (ncontext, natt), jnp.float32),
        "b_s2s": scale * jax.random.normal(k4, (1, natt), jnp.float32),
        # nn.Linear(natt, 1): stored as a column (natt, 1) -> MXU-ready
        "w_a2o": scale * jax.random.normal(k5, (natt, 1), jnp.float32),
        "b_a2o": scale * jax.random.normal(k6, (1, 1), jnp.float32),
    }


def reference_forward(hidden, mask, context, params, *, stream_dtype=jnp.bfloat16):
    """Pure-JAX reference mirroring the PyTorch module, evaluated on the same
    reduced-precision (bf16-quantized) operands the kernel streams, with f32
    accumulation — so kernel vs. reference differ only by rounding order."""
    B, S, C = context.shape
    q = lambda x: x.astype(stream_dtype).astype(jnp.float32)
    ctx = q(context)
    s2s = ctx.reshape(B * S, C) @ q(params["w_s2s"]) + params["b_s2s"]
    s2s = s2s.reshape(B, S, -1)
    h2s = q(hidden) @ q(params["w_h2s"]) + params["b_h2s"]
    t = jnp.tanh(s2s + h2s[:, None, :])
    w_a2o = q(params["w_a2o"])[:, 0]                              # (A,)
    logit = jnp.sum(q(t) * w_a2o[None, None, :], axis=-1) + params["b_a2o"][0, 0]
    any_mask = jnp.any(mask != 0.0)
    logit = jnp.where(jnp.logical_and(any_mask, mask != 1.0), -jnp.inf, logit)
    probs = jax.nn.softmax(logit, axis=1)
    return jnp.sum(probs[:, :, None] * ctx, axis=1)


if __name__ == "__main__":
    # Small but TPU-friendly shapes: batch tiled by 8, feature dims lane-dense
    # (multiples of 128), sequence a sublane multiple.
    B, S = 16, 8
    nhid = ncontext = natt = 128

    key = jax.random.PRNGKey(0)
    kp, kh, kc, km = jax.random.split(key, 4)

    params = init_params(kp, nhid, ncontext, natt)
    hidden = jax.random.normal(kh, (B, nhid), jnp.float32)
    context = jax.random.normal(kc, (B, S, ncontext), jnp.float32)
    # mask: 1.0 = attend, 0.0 = masked; keep >= 1 attended position per row
    # (a fully-masked row is a NaN source in the PyTorch module too).
    mask = (jax.random.uniform(km, (B, S)) > 0.3).astype(jnp.float32)
    mask = mask.at[:, 0].set(1.0)

    out = attention_forward(hidden, mask, context, params)
    out = jax.block_until_ready(out)

    ref = reference_forward(hidden, mask, context, params)
    assert out.shape == (B, ncontext)
    assert bool(jnp.all(jnp.isfinite(out))), "non-finite values in kernel output"
    max_err = float(jnp.max(jnp.abs(out - ref)))
    assert jnp.allclose(out, ref, atol=2e-3, rtol=2e-3), (
        f"mismatch vs reference, max abs err = {max_err}")

    print("KERNEL_OK")
</pallas_src>

<mosaic_0001>
module attributes {stable_mosaic.version = 11 : i64} {
  func.func @attention_kernel(%arg0: i32, %arg1: memref<16x128xbf16, #tpu.memory_space<vmem>>, %arg2: memref<16x8x1xf32, #tpu.memory_space<vmem>>, %arg3: memref<128x128xbf16, #tpu.memory_space<vmem>>, %arg4: memref<128x128xbf16, #tpu.memory_space<vmem>>, %arg5: memref<1x128xf32, #tpu.memory_space<vmem>>, %arg6: memref<128x128xbf16, #tpu.memory_space<vmem>>, %arg7: memref<1x128xf32, #tpu.memory_space<vmem>>, %arg8: memref<128x1xbf16, #tpu.memory_space<vmem>>, %arg9: memref<1x1xf32, #tpu.memory_space<smem>>, %arg10: memref<16x128xf32, #tpu.memory_space<vmem>>) attributes {dimension_semantics = [#tpu.dimension_semantics<parallel>], iteration_bounds = array<i64: 1>, scalar_prefetch = 0 : i64, scratch_operands = 0 : i64, tpu.core_type = #tpu.core_type<tc>, window_params = [{transform_indices = @transform_0, window_bounds = array<i64: 16, 128>}, {transform_indices = @transform_1, window_bounds = array<i64: 16, 8, 1>}, {transform_indices = @transform_2, window_bounds = array<i64: 128, 128>}, {pipeline_mode = #tpu.pipeline_mode<synchronous>, transform_indices = @transform_3, window_bounds = array<i64: 128, 128>}, {pipeline_mode = #tpu.pipeline_mode<synchronous>, transform_indices = @transform_4, window_bounds = array<i64: 1, 128>}, {pipeline_mode = #tpu.pipeline_mode<synchronous>, transform_indices = @transform_5, window_bounds = array<i64: 128, 128>}, {pipeline_mode = #tpu.pipeline_mode<synchronous>, transform_indices = @transform_6, window_bounds = array<i64: 1, 128>}, {pipeline_mode = #tpu.pipeline_mode<synchronous>, transform_indices = @transform_7, window_bounds = array<i64: 128, 1>}, {transform_indices = @transform_8, window_bounds = array<i64: 1, 1>}, {transform_indices = @transform_9, window_bounds = array<i64: 16, 128>}]} {
    %c0 = arith.constant 0 : index
    %c0_0 = arith.constant 0 : index
    %0 = vector.load %arg3[%c0, %c0_0] : memref<128x128xbf16, #tpu.memory_space<vmem>>, vector<128x128xbf16>
    %c0_1 = arith.constant 0 : index
    %c0_2 = arith.constant 0 : index
    %1 = vector.load %arg6[%c0_1, %c0_2] : memref<128x128xbf16, #tpu.memory_space<vmem>>, vector<128x128xbf16>
    %cst = arith.constant dense<0.000000e+00> : vector<128x128xf32>
    %2 = tpu.matmul %0, %1, %cst {dimension_numbers = #tpu.dot_dimension_numbers<[1], [0], [0], [1], [0, 0, 1, 1], [], []>} : vector<128x128xbf16>, vector<128x128xbf16>, vector<128x128xf32> -> vector<128x128xf32>
    %c0_3 = arith.constant 0 : index
    %c0_4 = arith.constant 0 : index
    %3 = vector.load %arg7[%c0_3, %c0_4] : memref<1x128xf32, #tpu.memory_space<vmem>>, vector<1x128xf32>
    %4 = vector.broadcast %3 : vector<1x128xf32> to vector<128x128xf32>
    %5 = arith.addf %2, %4 : vector<128x128xf32>
    %c0_5 = arith.constant 0 : index
    %c0_6 = arith.constant 0 : index
    %6 = vector.load %arg1[%c0_5, %c0_6] : memref<16x128xbf16, #tpu.memory_space<vmem>>, vector<16x128xbf16>
    %c0_7 = arith.constant 0 : index
    %c0_8 = arith.constant 0 : index
    %7 = vector.load %arg4[%c0_7, %c0_8] : memref<128x128xbf16, #tpu.memory_space<vmem>>, vector<128x128xbf16>
    %cst_9 = arith.constant dense<0.000000e+00> : vector<16x128xf32>
    %8 = tpu.matmul %6, %7, %cst_9 {dimension_numbers = #tpu.dot_dimension_numbers<[1], [0], [0], [1], [0, 0, 1, 1], [], []>} : vector<16x128xbf16>, vector<128x128xbf16>, vector<16x128xf32> -> vector<16x128xf32>
    %c0_10 = arith.constant 0 : index
    %c0_11 = arith.constant 0 : index
    %9 = vector.load %arg5[%c0_10, %c0_11] : memref<1x128xf32, #tpu.memory_space<vmem>>, vector<1x128xf32>
    %10 = vector.broadcast %9 : vector<1x128xf32> to vector<16x128xf32>
    %11 = arith.addf %8, %10 : vector<16x128xf32>
    %12 = vector.shape_cast %5 : vector<128x128xf32> to vector<16x8x128xf32>
    %13 = vector.shape_cast %11 : vector<16x128xf32> to vector<16x1x128xf32>
    %14 = vector.broadcast %13 : vector<16x1x128xf32> to vector<16x8x128xf32>
    %15 = arith.addf %12, %14 : vector<16x8x128xf32>
    %16 = math.tanh %15 : vector<16x8x128xf32>
    %17 = arith.truncf %16 : vector<16x8x128xf32> to vector<16x8x128xbf16>
    %18 = vector.shape_cast %17 : vector<16x8x128xbf16> to vector<128x128xbf16>
    %c0_12 = arith.constant 0 : index
    %c0_13 = arith.constant 0 : index
    %19 = vector.load %arg8[%c0_12, %c0_13] : memref<128x1xbf16, #tpu.memory_space<vmem>>, vector<128x1xbf16>
    %cst_14 = arith.constant dense<0.000000e+00> : vector<128x1xf32>
    %20 = tpu.matmul %18, %19, %cst_14 {dimension_numbers = #tpu.dot_dimension_numbers<[1], [0], [0], [1], [0, 0, 1, 1], [], []>} : vector<128x128xbf16>, vector<128x1xbf16>, vector<128x1xf32> -> vector<128x1xf32>
    %21 = vector.shape_cast %20 : vector<128x1xf32> to vector<16x8x1xf32>
    %c0_15 = arith.constant 0 : index
    %c0_16 = arith.constant 0 : index
    %22 = memref.load %arg9[%c0_15, %c0_16] : memref<1x1xf32, #tpu.memory_space<smem>>
    %23 = vector.broadcast %22 : f32 to vector<16x8x1xf32>
    %24 = arith.addf %21, %23 : vector<16x8x1xf32>
    %c0_17 = arith.constant 0 : index
    %c0_18 = arith.constant 0 : index
    %c0_19 = arith.constant 0 : index
    %25 = vector.load %arg2[%c0_17, %c0_18, %c0_19] : memref<16x8x1xf32, #tpu.memory_space<vmem>>, vector<16x8x1xf32>
    %26 = arith.addf %24, %25 : vector<16x8x1xf32>
    %cst_20 = arith.constant dense<0xFF800000> : vector<16x1xf32>
    %27 = vector.multi_reduction <maximumf>, %26, %cst_20 [1] : vector<16x8x1xf32> to vector<16x1xf32>
    %28 = vector.shape_cast %27 : vector<16x1xf32> to vector<16x1x1xf32>
    %29 = vector.broadcast %28 : vector<16x1x1xf32> to vector<16x8x1xf32>
    %30 = arith.subf %26, %29 : vector<16x8x1xf32>
    %31 = math.exp %30 : vector<16x8x1xf32>
    %cst_21 = arith.constant dense<0.000000e+00> : vector<16x1xf32>
    %32 = vector.multi_reduction <add>, %31, %cst_21 [1] : vector<16x8x1xf32> to vector<16x1xf32>
    %33 = vector.shape_cast %32 : vector<16x1xf32> to vector<16x1x1xf32>
    %34 = tpu.reciprocal %33 : vector<16x1x1xf32> -> vector<16x1x1xf32>
    %35 = vector.broadcast %34 : vector<16x1x1xf32> to vector<16x8x1xf32>
    %36 = arith.mulf %31, %35 : vector<16x8x1xf32>
    %37 = vector.shape_cast %0 : vector<128x128xbf16> to vector<16x8x128xbf16>
    %38 = arith.extf %37 : vector<16x8x128xbf16> to vector<16x8x128xf32>
    %39 = vector.broadcast %36 : vector<16x8x1xf32> to vector<16x8x128xf32>
    %40 = arith.mulf %39, %38 : vector<16x8x128xf32>
    %cst_22 = arith.constant dense<0.000000e+00> : vector<16x128xf32>
    %41 = vector.multi_reduction <add>, %40, %cst_22 [1] : vector<16x8x128xf32> to vector<16x128xf32>
    %c0_23 = arith.constant 0 : index
    %c0_24 = arith.constant 0 : index
    %42 = vector.load %arg10[%c0_23, %c0_24] : memref<16x128xf32, #tpu.memory_space<vmem>>, vector<16x128xf32>
    tpu.vector_store %arg10[%c0_23, %c0_24], %41 {strides = array<i32>} : memref<16x128xf32, #tpu.memory_space<vmem>>, vector<16x128xf32>,
    return
  }
  func.func @transform_0(%arg0: i32) -> (i32, i32) {
    %c0_i32 = arith.constant 0 : i32
    %c0_i32_0 = arith.constant 0 : i32
    return %arg0, %c0_i32 : i32, i32
  }
  func.func @transform_1(%arg0: i32) -> (i32, i32, i32) {
    %c0_i32 = arith.constant 0 : i32
    %c0_i32_0 = arith.constant 0 : i32
    %c0_i32_1 = arith.constant 0 : i32
    return %arg0, %c0_i32, %c0_i32_0 : i32, i32, i32
  }
  func.func @transform_2(%arg0: i32) -> (i32, i32) {
    %c0_i32 = arith.constant 0 : i32
    %c0_i32_0 = arith.constant 0 : i32
    return %arg0, %c0_i32 : i32, i32
  }
  func.func @transform_3(%arg0: i32) -> (i32, i32) {
    %c0_i32 = arith.constant 0 : i32
    %c0_i32_0 = arith.constant 0 : i32
    %c0_i32_1 = arith.constant 0 : i32
    return %c0_i32, %c0_i32_0 : i32, i32
  }
  func.func @transform_4(%arg0: i32) -> (i32, i32) {
    %c0_i32 = arith.constant 0 : i32
    %c0_i32_0 = arith.constant 0 : i32
    %c0_i32_1 = arith.constant 0 : i32
    return %c0_i32, %c0_i32_0 : i32, i32
  }
  func.func @transform_5(%arg0: i32) -> (i32, i32) {
    %c0_i32 = arith.constant 0 : i32
    %c0_i32_0 = arith.constant 0 : i32
    %c0_i32_1 = arith.constant 0 : i32
    return %c0_i32, %c0_i32_0 : i32, i32
  }
  func.func @transform_6(%arg0: i32) -> (i32, i32) {
    %c0_i32 = arith.constant 0 : i32
    %c0_i32_0 = arith.constant 0 : i32
    %c0_i32_1 = arith.constant 0 : i32
    return %c0_i32, %c0_i32_0 : i32, i32
  }
  func.func @transform_7(%arg0: i32) -> (i32, i32) {
    %c0_i32 = arith.constant 0 : i32
    %c0_i32_0 = arith.constant 0 : i32
    %c0_i32_1 = arith.constant 0 : i32
    return %c0_i32, %c0_i32_0 : i32, i32
  }
  func.func @transform_8(%arg0: i32) -> (i32, i32) {
    %c0_i32 = arith.constant 0 : i32
    %c0_i32_0 = arith.constant 0 : i32
    %c0_i32_1 = arith.constant 0 : i32
    return %c0_i32, %c0_i32_0 : i32, i32
  }
  func.func @transform_9(%arg0: i32) -> (i32, i32) {
    %c0_i32 = arith.constant 0 : i32
    %c0_i32_0 = arith.constant 0 : i32
    return %arg0, %c0_i32 : i32, i32
  }
}

</mosaic_0001>

<llo_original>
// kernel: tpu_custom_call.1
$region0: #{tpu_custom_call.1}
  #allocation0 [shape = 'u32[]', space=smem, size = 0x4, offset = 0x4, fixed_abs, tag = 'smem constant byte address 0x4 - core index']
  #allocation1 [shape = 'u32[144,128]{1,0:T(1,128)}', space=vmem, size = 0x12000, scoped, tag = 'internal scratch']
  #allocation2 [shape = 'f32[1,1]{1,0:T(1,128)S(6)}', space=smem, size = 0x200, scoped, tag = 'scoped memory for tpu_custom_call.1']
  %s0 = inlined_call_operand.hbm [shape: bf16[16,128], index: 0, kind: input, shape index: {}]
  %s1 = inlined_call_operand.vmem [shape: f32[16,8,1], index: 1, kind: input, shape index: {}]
  %s2 = inlined_call_operand.vmem [shape: bf16[128,128], index: 2, kind: input, shape index: {}]
  %s3 = inlined_call_operand.vmem [shape: bf16[128,128], index: 3, kind: input, shape index: {}]
  %s4 = inlined_call_operand.vmem [shape: f32[1,128], index: 4, kind: input, shape index: {}]
  %s5 = inlined_call_operand.vmem [shape: bf16[128,128], index: 5, kind: input, shape index: {}]
  %s6 = inlined_call_operand.vmem [shape: f32[1,128], index: 6, kind: input, shape index: {}]
  %s7 = inlined_call_operand.vmem [shape: bf16[128,1], index: 7, kind: input, shape index: {}]
  %s8 = inlined_call_operand.<no memory space> [shape: f32[1,1], index: 8, kind: input, shape index: {}]
  %s9 = inlined_call_operand.hbm [shape: f32[16,128], index: 9, kind: output, shape index: {}]
  %s10 = sld [smem:[#allocation0]]
  $region50: #{tpu_custom_call.1} parent=0
    _
  %s12 = ssub.s32 1, %s10
  %s13 = scalar_select 0, %s12, %s10
  %14 = sst [smem:[#allocation2]] %s8
  $region1: #{tpu_custom_call.1} parent=0
    #allocation3 [shape = 'u8[4096]{0}', space=vmem, size = 0x1000, scoped, tag = 'input window, operand 0, single buffered']
    #allocation4 [shape = 's32[1]{0}', space=sflag, size = 0x4, scoped, tag = 'scoped memory for tpu_custom_call.1']
    #allocation5 [shape = 's32[1]{0}', space=sflag, size = 0x4, scoped, tag = 'scoped memory for tpu_custom_call.1']
    #allocation6 [shape = 'u8[8192]{0}', space=vmem, size = 0x2000, scoped, tag = 'output window, operand 0, single buffered']
    %15 = vsyncpa [#allocation4], 0
    %16 = vsyncpa [#allocation5], 0
    // Predicated region
    $region2: #{tpu_custom_call.1} parent=1 // pred_check
      _
    $region3: #{tpu_custom_call.1} parent=1 // pred_check_branch
      %18 = sbr.rel (0) target = $region5
    $region4: #{tpu_custom_call.1} parent=1 // pred_region
      %s20 = ssub.s32 128, 128
      %21 = vsyncadd [#allocation4], %s20
      %s22 = sshll.u32 [#allocation3], 4
      %s23 = int_to_ptr.vmem [resolvable:$true] %s22
      %28 = dma.hbm_to_vmem [thread:$0]  %s0, 128, %s23, [#allocation4], 64, 64, 4
    $region5: #{tpu_custom_call.1} parent=1 // pred_fallthru
      _
    // Predicated region
    $region6: #{tpu_custom_call.1} parent=1 // pred_check
      _
    $region7: #{tpu_custom_call.1} parent=1 // pred_check_branch
      %30 = sbr.rel (0) target = $region9
    $region8: #{tpu_custom_call.1} parent=1 // pred_region
      _
    $region9: #{tpu_custom_call.1} parent=1 // pred_fallthru
      _
    // Predicated region
    $region10: #{tpu_custom_call.1} parent=1 // pred_check
      _
    $region11: #{tpu_custom_call.1} parent=1 // pred_check_branch
      %32 = sbr.rel (0) target = $region13
    $region12: #{tpu_custom_call.1} parent=1 // pred_region
      _
    $region13: #{tpu_custom_call.1} parent=1 // pred_fallthru
      _
    // Predicated region
    $region14: #{tpu_custom_call.1} parent=1 // pred_check
      _
    $region15: #{tpu_custom_call.1} parent=1 // pred_check_branch
      %34 = sbr.rel (0) target = $region17
    $region16: #{tpu_custom_call.1} parent=1 // pred_region
      _
    $region17: #{tpu_custom_call.1} parent=1 // pred_fallthru
      _
    // Predicated region
    $region18: #{tpu_custom_call.1} parent=1 // pred_check
      _
    $region19: #{tpu_custom_call.1} parent=1 // pred_check_branch
      %36 = sbr.rel (0) target = $region21
    $region20: #{tpu_custom_call.1} parent=1 // pred_region
      _
    $region21: #{tpu_custom_call.1} parent=1 // pred_fallthru
      _
    // Predicated region
    $region22: #{tpu_custom_call.1} parent=1 // pred_check
      _
    $region23: #{tpu_custom_call.1} parent=1 // pred_check_branch
      %38 = sbr.rel (0) target = $region25
    $region24: #{tpu_custom_call.1} parent=1 // pred_region
      _
    $region25: #{tpu_custom_call.1} parent=1 // pred_fallthru
      _
    // Predicated region
    $region26: #{tpu_custom_call.1} parent=1 // pred_check
      _
    $region27: #{tpu_custom_call.1} parent=1 // pred_check_branch
      %40 = sbr.rel (0) target = $region29
    $region28: #{tpu_custom_call.1} parent=1 // pred_region
      _
    $region29: #{tpu_custom_call.1} parent=1 // pred_fallthru
      _
    // Predicated region
    $region30: #{tpu_custom_call.1} parent=1 // pred_check
      _
    $region31: #{tpu_custom_call.1} parent=1 // pred_check_branch
      %42 = sbr.rel (0) target = $region33
    $region32: #{tpu_custom_call.1} parent=1 // pred_region
      _
    $region33: #{tpu_custom_call.1} parent=1 // pred_fallthru
      _
    // Predicated region
    $region34: #{tpu_custom_call.1} parent=1 // pred_check
      _
    $region35: #{tpu_custom_call.1} parent=1 // pred_check_branch
      %44 = sbr.rel (0) target = $region37
    $region36: #{tpu_custom_call.1} parent=1 // pred_region
      _
    $region37: #{tpu_custom_call.1} parent=1 // pred_fallthru
      _
    // Predicated region
    $region38: #{tpu_custom_call.1} parent=1 // pred_check
      _
    $region39: #{tpu_custom_call.1} parent=1 // pred_check_branch
      %46 = sbr.rel (0) target = $region41
    $region40: #{tpu_custom_call.1} parent=1 // pred_region
      %47 = dma.done [#allocation4], 128
    $region41: #{tpu_custom_call.1} parent=1 // pred_fallthru
      _
    %v49 = vld [vmem:[%s2] sm:$0xf]
    %v50 = vld [vmem:[%s2 + $0x4] sm:$0xf]
    %v51 = vld [vmem:[%s2 + $0x8] sm:$0xf]
    %v52 = vld [vmem:[%s2 + $0xc] sm:$0xf]
    %v53 = vld [vmem:[%s2 + $0x10] sm:$0xf]
    %v54 = vld [vmem:[%s2 + $0x14] sm:$0xf]
    %v55 = vld [vmem:[%s2 + $0x18] sm:$0xf]
    %v56 = vld [vmem:[%s2 + $0x1c] sm:$0xf]
    %v57 = vld [vmem:[%s2 + $0x20] sm:$0xf]
    %v58 = vld [vmem:[%s2 + $0x24] sm:$0xf]
    %v59 = vld [vmem:[%s2 + $0x28] sm:$0xf]
    %v60 = vld [vmem:[%s2 + $0x2c] sm:$0xf]
    %v61 = vld [vmem:[%s2 + $0x30] sm:$0xf]
    %v62 = vld [vmem:[%s2 + $0x34] sm:$0xf]
    %v63 = vld [vmem:[%s2 + $0x38] sm:$0xf]
    %v64 = vld [vmem:[%s2 + $0x3c] sm:$0xf]
    %v65 = vld [vmem:[%s5] sm:$0xf]
    %v66 = vld [vmem:[%s5 + $0x4] sm:$0xf]
    %v67 = vld [vmem:[%s5 + $0x8] sm:$0xf]
    %v68 = vld [vmem:[%s5 + $0xc] sm:$0xf]
    %v69 = vld [vmem:[%s5 + $0x10] sm:$0xf]
    %v70 = vld [vmem:[%s5 + $0x14] sm:$0xf]
    %v71 = vld [vmem:[%s5 + $0x18] sm:$0xf]
    %v72 = vld [vmem:[%s5 + $0x1c] sm:$0xf]
    %v73 = vld [vmem:[%s5 + $0x20] sm:$0xf]
    %v74 = vld [vmem:[%s5 + $0x24] sm:$0xf]
    %v75 = vld [vmem:[%s5 + $0x28] sm:$0xf]
    %v76 = vld [vmem:[%s5 + $0x2c] sm:$0xf]
    %v77 = vld [vmem:[%s5 + $0x30] sm:$0xf]
    %v78 = vld [vmem:[%s5 + $0x34] sm:$0xf]
    %v79 = vld [vmem:[%s5 + $0x38] sm:$0xf]
    %v80 = vld [vmem:[%s5 + $0x3c] sm:$0xf]
    %v81 = vld [vmem:[%s6] sm:$0x1]
    %v83 = vlaneseq
    %v84 = vshrl.u32 %v83, 7
    %v85 = vsub.s32 0, %v84
    %v86 = vrot.slane %v81, %v85
    %v104 = vunpack.c.l.b16 %v49
    %v105 = vunpack.c.l.b16 %v50
    %v106 = vunpack.c.l.b16 %v51
    %v107 = vunpack.c.l.b16 %v52
    %v108 = vunpack.c.l.b16 %v53
    %v109 = vunpack.c.l.b16 %v54
    %v110 = vunpack.c.l.b16 %v55
    %v111 = vunpack.c.l.b16 %v56
    %v112 = vunpack.c.l.b16 %v57
    %v113 = vunpack.c.l.b16 %v58
    %v114 = vunpack.c.l.b16 %v59
    %v115 = vunpack.c.l.b16 %v60
    %v116 = vunpack.c.l.b16 %v61
    %v117 = vunpack.c.l.b16 %v62
    %v118 = vunpack.c.l.b16 %v63
    %v119 = vunpack.c.l.b16 %v64
    %v120 = vpack.c.b16 %v105, %v104
    %v121 = vpack.c.b16 %v107, %v106
    %v122 = vpack.c.b16 %v109, %v108
    %v123 = vpack.c.b16 %v111, %v110
    %v124 = vpack.c.b16 %v113, %v112
    %v125 = vpack.c.b16 %v115, %v114
    %v126 = vpack.c.b16 %v117, %v116
    %v127 = vpack.c.b16 %v119, %v118
    %v152 = vunpack.c.l.b16 %v65
    %v153 = vunpack.c.l.b16 %v66
    %v154 = vunpack.c.l.b16 %v67
    %v155 = vunpack.c.l.b16 %v68
    %v156 = vunpack.c.l.b16 %v69
    %v157 = vunpack.c.l.b16 %v70
    %v158 = vunpack.c.l.b16 %v71
    %v159 = vunpack.c.l.b16 %v72
    %v160 = vunpack.c.l.b16 %v73
    %v161 = vunpack.c.l.b16 %v74
    %v162 = vunpack.c.l.b16 %v75
    %v163 = vunpack.c.l.b16 %v76
    %v164 = vunpack.c.l.b16 %v77
    %v165 = vunpack.c.l.b16 %v78
    %v166 = vunpack.c.l.b16 %v79
    %v167 = vunpack.c.l.b16 %v80
    %v168 = vpack.c.b16 %v153, %v152
    %v169 = vpack.c.b16 %v155, %v154
    %v170 = vpack.c.b16 %v157, %v156
    %v171 = vpack.c.b16 %v159, %v158
    %v172 = vpack.c.b16 %v161, %v160
    %v173 = vpack.c.b16 %v163, %v162
    %v174 = vpack.c.b16 %v165, %v164
    %v175 = vpack.c.b16 %v167, %v166
    %184 = vmatprep.subr.bf16.mxu0 0
    %185 = vmatpush1.bf16.msra.mxu0 %v175
    %186 = vmatprep.subr.bf16.mxu0 0
    %187 = vmatpush1.bf16.msra.mxu0 %v174
    %188 = vmatprep.subr.bf16.mxu0 0
    %189 = vmatpush1.bf16.msra.mxu0 %v173
    %190 = vmatprep.subr.bf16.mxu0 0
    %191 = vmatpush1.bf16.msra.mxu0 %v172
    %192 = vmatprep.subr.bf16.mxu0 0
    %193 = vmatpush1.bf16.msra.mxu0 %v171
    %194 = vmatprep.subr.bf16.mxu0 0
    %195 = vmatpush1.bf16.msra.mxu0 %v170
    %196 = vmatprep.subr.bf16.mxu0 0
    %197 = vmatpush1.bf16.msra.mxu0 %v169
    %198 = vmatprep.subr.bf16.mxu0 0
    %199 = vmatpush1.bf16.msra.mxu0 %v168
    %200 = vmatprep.subr.bf16.mxu0 0
    %201 = vmatpush2.bf16.msra.mxu0 0
    %202 = vmatprep.subr.bf16.mxu0 0
    %203 = vmatpush2.bf16.msra.mxu0 0
    %204 = vmatprep.subr.bf16.mxu0 0
    %205 = vmatpush2.bf16.msra.mxu0 0
    %206 = vmatprep.subr.bf16.mxu0 0
    %207 = vmatpush2.bf16.msra.mxu0 0
    %208 = vmatprep.subr.bf16.mxu0 0
    %209 = vmatpush2.bf16.msra.mxu0 0
    %210 = vmatprep.subr.bf16.mxu0 0
    %211 = vmatpush2.bf16.msra.mxu0 0
    %212 = vmatprep.subr.bf16.mxu0 0
    %213 = vmatpush2.bf16.msra.mxu0 0
    %214 = vmatprep.subr.bf16.mxu0 0
    %215 = vmatpush2.bf16.msra.mxu0 0
    %216 = vmatprep.mubr.bf16.mxu0 0
    %217 = vmatmul.mubr.bf16.gmra.mxu0 %v120
    %v218 = vpop.f32.mrf.mxu0
    %v219 = vadd.f32 %v86, %v218
    %v220 = vpop.f32.mrf.mxu0
    %v221 = vpop.f32.mrf.mxu0
    %v222 = vadd.f32 %v86, %v221
    %v223 = vpop.f32.mrf.mxu0
    %224 = vmatprep.mubr.bf16.mxu0 0
    %225 = vmatmul.mubr.bf16.gmra.mxu0 %v121
    %v226 = vpop.f32.mrf.mxu0
    %v227 = vadd.f32 %v86, %v226
    %v228 = vpop.f32.mrf.mxu0
    %v229 = vpop.f32.mrf.mxu0
    %v230 = vadd.f32 %v86, %v229
    %v231 = vpop.f32.mrf.mxu0
    %232 = vmatprep.mubr.bf16.mxu0 0
    %233 = vmatmul.mubr.bf16.gmra.mxu0 %v122
    %v234 = vpop.f32.mrf.mxu0
    %v235 = vadd.f32 %v86, %v234
    %v236 = vpop.f32.mrf.mxu0
    %v237 = vpop.f32.mrf.mxu0
    %v238 = vadd.f32 %v86, %v237
    %v239 = vpop.f32.mrf.mxu0
    %240 = vmatprep.mubr.bf16.mxu0 0
    %241 = vmatmul.mubr.bf16.gmra.mxu0 %v123
    %v242 = vpop.f32.mrf.mxu0
    %v243 = vadd.f32 %v86, %v242
    %v244 = vpop.f32.mrf.mxu0
    %v245 = vpop.f32.mrf.mxu0
    %v246 = vadd.f32 %v86, %v245
    %v247 = vpop.f32.mrf.mxu0
    %248 = vmatprep.mubr.bf16.mxu0 0
    %249 = vmatmul.mubr.bf16.gmra.mxu0 %v124
    %v250 = vpop.f32.mrf.mxu0
    %v251 = vadd.f32 %v86, %v250
    %v252 = vpop.f32.mrf.mxu0
    %v253 = vpop.f32.mrf.mxu0
    %v254 = vadd.f32 %v86, %v253
    %v255 = vpop.f32.mrf.mxu0
    %256 = vmatprep.mubr.bf16.mxu0 0
    %257 = vmatmul.mubr.bf16.gmra.mxu0 %v125
    %v258 = vpop.f32.mrf.mxu0
    %v259 = vadd.f32 %v86, %v258
    %v260 = vpop.f32.mrf.mxu0
    %v261 = vpop.f32.mrf.mxu0
    %v262 = vadd.f32 %v86, %v261
    %v263 = vpop.f32.mrf.mxu0
    %264 = vmatprep.mubr.bf16.mxu0 0
    %265 = vmatmul.mubr.bf16.gmra.mxu0 %v126
    %v266 = vpop.f32.mrf.mxu0
    %v267 = vadd.f32 %v86, %v266
    %v268 = vpop.f32.mrf.mxu0
    %v269 = vpop.f32.mrf.mxu0
    %v270 = vadd.f32 %v86, %v269
    %v271 = vpop.f32.mrf.mxu0
    %272 = vmatprep.mubr.bf16.mxu0 0
    %273 = vmatmul.mubr.bf16.gmra.mxu0 %v127
    %v274 = vpop.f32.mrf.mxu0
    %v275 = vadd.f32 %v86, %v274
    %v276 = vpop.f32.mrf.mxu0
    %v277 = vpop.f32.mrf.mxu0
    %v278 = vadd.f32 %v86, %v277
    %v279 = vpop.f32.mrf.mxu0
    %280 = vdwg.mxu0
    %v281 = vld [vmem:[#allocation3] sm:$0xf]
    %v282 = vld [vmem:[#allocation3 + $0x4] sm:$0xf]
    %v283 = vld [vmem:[%s3] sm:$0xf]
    %v284 = vld [vmem:[%s3 + $0x4] sm:$0xf]
    %v285 = vld [vmem:[%s3 + $0x8] sm:$0xf]
    %v286 = vld [vmem:[%s3 + $0xc] sm:$0xf]
    %v287 = vld [vmem:[%s3 + $0x10] sm:$0xf]
    %v288 = vld [vmem:[%s3 + $0x14] sm:$0xf]
    %v289 = vld [vmem:[%s3 + $0x18] sm:$0xf]
    %v290 = vld [vmem:[%s3 + $0x1c] sm:$0xf]
    %v291 = vld [vmem:[%s3 + $0x20] sm:$0xf]
    %v292 = vld [vmem:[%s3 + $0x24] sm:$0xf]
    %v293 = vld [vmem:[%s3 + $0x28] sm:$0xf]
    %v294 = vld [vmem:[%s3 + $0x2c] sm:$0xf]
    %v295 = vld [vmem:[%s3 + $0x30] sm:$0xf]
    %v296 = vld [vmem:[%s3 + $0x34] sm:$0xf]
    %v297 = vld [vmem:[%s3 + $0x38] sm:$0xf]
    %v298 = vld [vmem:[%s3 + $0x3c] sm:$0xf]
    %v299 = vld [vmem:[%s4] sm:$0x1]
    %v301 = vlaneseq
    %v302 = vshrl.u32 %v301, 7
    %v303 = vsub.s32 0, %v302
    %v304 = vrot.slane %v299, %v303
    %v308 = vunpack.c.l.b16 %v281
    %v309 = vunpack.c.l.b16 %v282
    %v310 = vpack.c.b16 %v309, %v308
    %v328 = vunpack.c.l.b16 %v283
    %v329 = vunpack.c.l.b16 %v284
    %v330 = vunpack.c.l.b16 %v285
    %v331 = vunpack.c.l.b16 %v286
    %v332 = vunpack.c.l.b16 %v287
    %v333 = vunpack.c.l.b16 %v288
    %v334 = vunpack.c.l.b16 %v289
    %v335 = vunpack.c.l.b16 %v290
    %v336 = vunpack.c.l.b16 %v291
    %v337 = vunpack.c.l.b16 %v292
    %v338 = vunpack.c.l.b16 %v293
    %v339 = vunpack.c.l.b16 %v294
    %v340 = vunpack.c.l.b16 %v295
    %v341 = vunpack.c.l.b16 %v296
    %v342 = vunpack.c.l.b16 %v297
    %v343 = vunpack.c.l.b16 %v298
    %v344 = vpack.c.b16 %v329, %v328
    %v345 = vpack.c.b16 %v331, %v330
    %v346 = vpack.c.b16 %v333, %v332
    %v347 = vpack.c.b16 %v335, %v334
    %v348 = vpack.c.b16 %v337, %v336
    %v349 = vpack.c.b16 %v339, %v338
    %v350 = vpack.c.b16 %v341, %v340
    %v351 = vpack.c.b16 %v343, %v342
    %360 = vmatprep.subr.bf16.mxu0 0
    %361 = vmatpush1.bf16.msra.mxu0 %v351
    %362 = vmatprep.subr.bf16.mxu0 0
    %363 = vmatpush1.bf16.msra.mxu0 %v350
    %364 = vmatprep.subr.bf16.mxu0 0
    %365 = vmatpush1.bf16.msra.mxu0 %v349
    %366 = vmatprep.subr.bf16.mxu0 0
    %367 = vmatpush1.bf16.msra.mxu0 %v348
    %368 = vmatprep.subr.bf16.mxu0 0
    %369 = vmatpush1.bf16.msra.mxu0 %v347
    %370 = vmatprep.subr.bf16.mxu0 0
    %371 = vmatpush1.bf16.msra.mxu0 %v346
    %372 = vmatprep.subr.bf16.mxu0 0
    %373 = vmatpush1.bf16.msra.mxu0 %v345
    %374 = vmatprep.subr.bf16.mxu0 0
    %375 = vmatpush1.bf16.msra.mxu0 %v344
    %376 = vmatprep.subr.bf16.mxu0 0
    %377 = vmatpush2.bf16.msra.mxu0 0
    %378 = vmatprep.subr.bf16.mxu0 0
    %379 = vmatpush2.bf16.msra.mxu0 0
    %380 = vmatprep.subr.bf16.mxu0 0
    %381 = vmatpush2.bf16.msra.mxu0 0
    %382 = vmatprep.subr.bf16.mxu0 0
    %383 = vmatpush2.bf16.msra.mxu0 0
    %384 = vmatprep.subr.bf16.mxu0 0
    %385 = vmatpush2.bf16.msra.mxu0 0
    %386 = vmatprep.subr.bf16.mxu0 0
    %387 = vmatpush2.bf16.msra.mxu0 0
    %388 = vmatprep.subr.bf16.mxu0 0
    %389 = vmatpush2.bf16.msra.mxu0 0
    %390 = vmatprep.subr.bf16.mxu0 0
    %391 = vmatpush2.bf16.msra.mxu0 0
    %392 = vmatprep.mubr.bf16.mxu0 0
    %393 = vmatmul.mubr.bf16.gmra.mxu0 %v310
    %v394 = vpop.f32.mrf.mxu0
    %v395 = vadd.f32 %v304, %v394
    %v396 = vpop.f32.mrf.mxu0
    %v397 = vpop.f32.mrf.mxu0
    %v398 = vadd.f32 %v304, %v397
    %v399 = vpop.f32.mrf.mxu0
    %400 = vdwg.mxu0
    %v403 = vcombine.high %v395, %v395
    %v405 = vunpack.c.l.s4 1966171168
    %v406 = vunpack.c.0.s8 %v405
    %v407 = vlaneseq
    %v408 = vshrl.u32 %v407, 7
    %v409 = vsub.s32 %v406, %v408
    %v410 = vrot.slane %v395, %v409
    %v412 = vunpack.c.l.s4 1966171168
    %v413 = vunpack.c.0.s8 %v412
    %v414 = vlaneseq
    %v415 = vshrl.u32 %v414, 7
    %v416 = vsub.s32 %v413, %v415
    %v417 = vrot.slane %v403, %v416
    %v418 = vcombine.high %v410, %v410
    %v419 = vcombine.high %v417, %v417
    %v421 = vunpack.c.l.s4 1966171168
    %v422 = vunpack.c.0.s8 %v421
    %v423 = vlaneseq
    %v424 = vshrl.u32 %v423, 7
    %v425 = vsub.s32 %v422, %v424
    %v426 = vrot.slane %v410, %v425
    %v428 = vunpack.c.l.s4 1966171168
    %v429 = vunpack.c.0.s8 %v428
    %v430 = vlaneseq
    %v431 = vshrl.u32 %v430, 7
    %v432 = vsub.s32 %v429, %v431
    %v433 = vrot.slane %v417, %v432
    %v435 = vunpack.c.l.s4 1966171168
    %v436 = vunpack.c.0.s8 %v435
    %v437 = vlaneseq
    %v438 = vshrl.u32 %v437, 7
    %v439 = vsub.s32 %v436, %v438
    %v440 = vrot.slane %v418, %v439
    %v442 = vunpack.c.l.s4 1966171168
    %v443 = vunpack.c.0.s8 %v442
    %v444 = vlaneseq
    %v445 = vshrl.u32 %v444, 7
    %v446 = vsub.s32 %v443, %v445
    %v447 = vrot.slane %v419, %v446
    %v448 = vcombine.high %v426, %v426
    %v449 = vcombine.high %v433, %v433
    %v450 = vcombine.high %v440, %v440
    %v451 = vcombine.high %v447, %v447
    %v452 = vcombine.high %v398, %v398
    %v454 = vunpack.c.l.s4 1966171168
    %v455 = vunpack.c.0.s8 %v454
    %v456 = vlaneseq
    %v457 = vshrl.u32 %v456, 7
    %v458 = vsub.s32 %v455, %v457
    %v459 = vrot.slane %v398, %v458
    %v461 = vunpack.c.l.s4 1966171168
    %v462 = vunpack.c.0.s8 %v461
    %v463 = vlaneseq
    %v464 = vshrl.u32 %v463, 7
    %v465 = vsub.s32 %v462, %v464
    %v466 = vrot.slane %v452, %v465
    %v467 = vcombine.high %v459, %v459
    %v468 = vcombine.high %v466, %v466
    %v470 = vunpack.c.l.s4 1966171168
    %v471 = vunpack.c.0.s8 %v470
    %v472 = vlaneseq
    %v473 = vshrl.u32 %v472, 7
    %v474 = vsub.s32 %v471, %v473
    %v475 = vrot.slane %v459, %v474
    %v477 = vunpack.c.l.s4 1966171168
    %v478 = vunpack.c.0.s8 %v477
    %v479 = vlaneseq
    %v480 = vshrl.u32 %v479, 7
    %v481 = vsub.s32 %v478, %v480
    %v482 = vrot.slane %v466, %v481
    %v484 = vunpack.c.l.s4 1966171168
    %v485 = vunpack.c.0.s8 %v484
    %v486 = vlaneseq
    %v487 = vshrl.u32 %v486, 7
    %v488 = vsub.s32 %v485, %v487
    %v489 = vrot.slane %v467, %v488
    %v491 = vunpack.c.l.s4 1966171168
    %v492 = vunpack.c.0.s8 %v491
    %v493 = vlaneseq
    %v494 = vshrl.u32 %v493, 7
    %v495 = vsub.s32 %v492, %v494
    %v496 = vrot.slane %v468, %v495
    %v497 = vcombine.high %v475, %v475
    %v498 = vcombine.high %v482, %v482
    %v499 = vcombine.high %v489, %v489
    %v500 = vcombine.high %v496, %v496
    %v501 = vlaneseq
    %v502 = vshrl.u32 %v501, 7
    %v503 = vsub.s32 0, %v502
    %v504 = vrot.slane %v426, %v503
    %v505 = vlaneseq
    %v506 = vshrl.u32 %v505, 7
    %v507 = vsub.s32 0, %v506
    %v508 = vrot.slane %v440, %v507
    %v509 = vlaneseq
    %v510 = vshrl.u32 %v509, 7
    %v511 = vsub.s32 0, %v510
    %v512 = vrot.slane %v448, %v511
    %v513 = vlaneseq
    %v514 = vshrl.u32 %v513, 7
    %v515 = vsub.s32 0, %v514
    %v516 = vrot.slane %v450, %v515
    %v517 = vlaneseq
    %v518 = vshrl.u32 %v517, 7
    %v519 = vsub.s32 0, %v518
    %v520 = vrot.slane %v433, %v519
    %v521 = vlaneseq
    %v522 = vshrl.u32 %v521, 7
    %v523 = vsub.s32 0, %v522
    %v524 = vrot.slane %v447, %v523
    %v525 = vlaneseq
    %v526 = vshrl.u32 %v525, 7
    %v527 = vsub.s32 0, %v526
    %v528 = vrot.slane %v449, %v527
    %v529 = vlaneseq
    %v530 = vshrl.u32 %v529, 7
    %v531 = vsub.s32 0, %v530
    %v532 = vrot.slane %v451, %v531
    %v533 = vlaneseq
    %v534 = vshrl.u32 %v533, 7
    %v535 = vsub.s32 0, %v534
    %v536 = vrot.slane %v475, %v535
    %v537 = vlaneseq
    %v538 = vshrl.u32 %v537, 7
    %v539 = vsub.s32 0, %v538
    %v540 = vrot.slane %v489, %v539
    %v541 = vlaneseq
    %v542 = vshrl.u32 %v541, 7
    %v543 = vsub.s32 0, %v542
    %v544 = vrot.slane %v497, %v543
    %v545 = vlaneseq
    %v546 = vshrl.u32 %v545, 7
    %v547 = vsub.s32 0, %v546
    %v548 = vrot.slane %v499, %v547
    %v549 = vlaneseq
    %v550 = vshrl.u32 %v549, 7
    %v551 = vsub.s32 0, %v550
    %v552 = vrot.slane %v482, %v551
    %v553 = vlaneseq
    %v554 = vshrl.u32 %v553, 7
    %v555 = vsub.s32 0, %v554
    %v556 = vrot.slane %v496, %v555
    %v557 = vlaneseq
    %v558 = vshrl.u32 %v557, 7
    %v559 = vsub.s32 0, %v558
    %v560 = vrot.slane %v498, %v559
    %v561 = vlaneseq
    %v562 = vshrl.u32 %v561, 7
    %v563 = vsub.s32 0, %v562
    %v564 = vrot.slane %v500, %v563
    %v581 = vadd.f32 %v219, %v504
    %v582 = vadd.f32 %v222, %v508
    %v583 = vadd.f32 %v227, %v512
    %v584 = vadd.f32 %v230, %v516
    %v585 = vadd.f32 %v235, %v520
    %v586 = vadd.f32 %v238, %v524
    %v587 = vadd.f32 %v243, %v528
    %v588 = vadd.f32 %v246, %v532
    %v589 = vadd.f32 %v251, %v536
    %v590 = vadd.f32 %v254, %v540
    %v591 = vadd.f32 %v259, %v544
    %v592 = vadd.f32 %v262, %v548
    %v593 = vadd.f32 %v267, %v552
    %v594 = vadd.f32 %v270, %v556
    %v595 = vadd.f32 %v275, %v560
    %v596 = vadd.f32 %v278, %v564
    %v597 = vtanh.pop %v581
    %v598 = vtanh.pop %v582
    %v599 = vtanh.pop %v583
    %v600 = vtanh.pop %v584
    %v601 = vtanh.pop %v585
    %v602 = vtanh.pop %v586
    %v603 = vtanh.pop %v587
    %v604 = vtanh.pop %v588
    %v605 = vtanh.pop %v589
    %v606 = vtanh.pop %v590
    %v607 = vtanh.pop %v591
    %v608 = vtanh.pop %v592
    %v609 = vtanh.pop %v593
    %v610 = vtanh.pop %v594
    %v611 = vtanh.pop %v595
    %v612 = vtanh.pop %v596
    %v613 = vpack.c.bf16 %v597, %v597
    %v614 = vpack.c.bf16 %v598, %v598
    %v615 = vpack.c.bf16 %v599, %v599
    %v616 = vpack.c.bf16 %v600, %v600
    %v617 = vpack.c.bf16 %v601, %v601
    %v618 = vpack.c.bf16 %v602, %v602
    %v619 = vpack.c.bf16 %v603, %v603
    %v620 = vpack.c.bf16 %v604, %v604
    %v621 = vpack.c.bf16 %v605, %v605
    %v622 = vpack.c.bf16 %v606, %v606
    %v623 = vpack.c.bf16 %v607, %v607
    %v624 = vpack.c.bf16 %v608, %v608
    %v625 = vpack.c.bf16 %v609, %v609
    %v626 = vpack.c.bf16 %v610, %v610
    %v627 = vpack.c.bf16 %v611, %v611
    %v628 = vpack.c.bf16 %v612, %v612
    %v629 = vld [vmem:[%s7] sm:$0xf]
    %v630 = vld [vmem:[%s7 + $0x4] sm:$0xf]
    %v631 = vld [vmem:[%s7 + $0x8] sm:$0xf]
    %v632 = vld [vmem:[%s7 + $0xc] sm:$0xf]
    %v633 = vld [vmem:[%s7 + $0x10] sm:$0xf]
    %v634 = vld [vmem:[%s7 + $0x14] sm:$0xf]
    %v635 = vld [vmem:[%s7 + $0x18] sm:$0xf]
    %v636 = vld [vmem:[%s7 + $0x1c] sm:$0xf]
    %v637 = vld [vmem:[%s7 + $0x20] sm:$0xf]
    %v638 = vld [vmem:[%s7 + $0x24] sm:$0xf]
    %v639 = vld [vmem:[%s7 + $0x28] sm:$0xf]
    %v640 = vld [vmem:[%s7 + $0x2c] sm:$0xf]
    %v641 = vld [vmem:[%s7 + $0x30] sm:$0xf]
    %v642 = vld [vmem:[%s7 + $0x34] sm:$0xf]
    %v643 = vld [vmem:[%s7 + $0x38] sm:$0xf]
    %v644 = vld [vmem:[%s7 + $0x3c] sm:$0xf]
    %v661 = vunpack.c.l.b16 %v613
    %v662 = vunpack.c.l.b16 %v614
    %v663 = vunpack.c.l.b16 %v615
    %v664 = vunpack.c.l.b16 %v616
    %v665 = vunpack.c.l.b16 %v617
    %v666 = vunpack.c.l.b16 %v618
    %v667 = vunpack.c.l.b16 %v619
    %v668 = vunpack.c.l.b16 %v620
    %v669 = vunpack.c.l.b16 %v621
    %v670 = vunpack.c.l.b16 %v622
    %v671 = vunpack.c.l.b16 %v623
    %v672 = vunpack.c.l.b16 %v624
    %v673 = vunpack.c.l.b16 %v625
    %v674 = vunpack.c.l.b16 %v626
    %v675 = vunpack.c.l.b16 %v627
    %v676 = vunpack.c.l.b16 %v628
    %v677 = vpack.c.b16 %v662, %v661
    %v678 = vpack.c.b16 %v664, %v663
    %v679 = vpack.c.b16 %v666, %v665
    %v680 = vpack.c.b16 %v668, %v667
    %v681 = vpack.c.b16 %v670, %v669
    %v682 = vpack.c.b16 %v672, %v671
    %v683 = vpack.c.b16 %v674, %v673
    %v684 = vpack.c.b16 %v676, %v675
    %v709 = vunpack.c.l.b16 %v629
    %v710 = vunpack.c.l.b16 %v630
    %v711 = vunpack.c.l.b16 %v631
    %v712 = vunpack.c.l.b16 %v632
    %v713 = vunpack.c.l.b16 %v633
    %v714 = vunpack.c.l.b16 %v634
    %v715 = vunpack.c.l.b16 %v635
    %v716 = vunpack.c.l.b16 %v636
    %v717 = vunpack.c.l.b16 %v637
    %v718 = vunpack.c.l.b16 %v638
    %v719 = vunpack.c.l.b16 %v639
    %v720 = vunpack.c.l.b16 %v640
    %v721 = vunpack.c.l.b16 %v641
    %v722 = vunpack.c.l.b16 %v642
    %v723 = vunpack.c.l.b16 %v643
    %v724 = vunpack.c.l.b16 %v644
    %v725 = vpack.c.b16 %v710, %v709
    %v726 = vpack.c.b16 %v712, %v711
    %v727 = vpack.c.b16 %v714, %v713
    %v728 = vpack.c.b16 %v716, %v715
    %v729 = vpack.c.b16 %v718, %v717
    %v730 = vpack.c.b16 %v720, %v719
    %v731 = vpack.c.b16 %v722, %v721
    %v732 = vpack.c.b16 %v724, %v723
    %741 = vmatprep.subr.bf16.mxu0 0
    %742 = vmatpush1.bf16.msra.mxu0 %v732
    %743 = vmatprep.subr.bf16.mxu0 0
    %744 = vmatpush1.bf16.msra.mxu0 %v731
    %745 = vmatprep.subr.bf16.mxu0 0
    %746 = vmatpush1.bf16.msra.mxu0 %v730
    %747 = vmatprep.subr.bf16.mxu0 0
    %748 = vmatpush1.bf16.msra.mxu0 %v729
    %749 = vmatprep.subr.bf16.mxu0 0
    %750 = vmatpush1.bf16.msra.mxu0 %v728
    %751 = vmatprep.subr.bf16.mxu0 0
    %752 = vmatpush1.bf16.msra.mxu0 %v727
    %753 = vmatprep.subr.bf16.mxu0 0
    %754 = vmatpush1.bf16.msra.mxu0 %v726
    %755 = vmatprep.subr.bf16.mxu0 0
    %756 = vmatpush1.bf16.msra.mxu0 %v725
    %757 = vmatprep.subr.bf16.mxu0 0
    %758 = vmatpush2.bf16.msra.mxu0 0
    %759 = vmatprep.subr.bf16.mxu0 0
    %760 = vmatpush2.bf16.msra.mxu0 0
    %761 = vmatprep.subr.bf16.mxu0 0
    %762 = vmatpush2.bf16.msra.mxu0 0
    %763 = vmatprep.subr.bf16.mxu0 0
    %764 = vmatpush2.bf16.msra.mxu0 0
    %765 = vmatprep.subr.bf16.mxu0 0
    %766 = vmatpush2.bf16.msra.mxu0 0
    %767 = vmatprep.subr.bf16.mxu0 0
    %768 = vmatpush2.bf16.msra.mxu0 0
    %769 = vmatprep.subr.bf16.mxu0 0
    %770 = vmatpush2.bf16.msra.mxu0 0
    %771 = vmatprep.subr.bf16.mxu0 0
    %772 = vmatpush2.bf16.msra.mxu0 0
    %773 = vmatprep.mubr.bf16.mxu0 0
    %774 = vmatmul.mubr.bf16.gmra.mxu0 %v677
    %v775 = vpop.f32.mrf.mxu0
    %v776 = vadd.f32 0.0, %v775
    %v777 = vpop.f32.mrf.mxu0
    %v778 = vpop.f32.mrf.mxu0
    %v779 = vadd.f32 0.0, %v778
    %v780 = vpop.f32.mrf.mxu0
    %781 = vmatprep.mubr.bf16.mxu0 0
    %782 = vmatmul.mubr.bf16.gmra.mxu0 %v678
    %v783 = vpop.f32.mrf.mxu0
    %v784 = vadd.f32 0.0, %v783
    %v785 = vpop.f32.mrf.mxu0
    %v786 = vpop.f32.mrf.mxu0
    %v787 = vadd.f32 0.0, %v786
    %v788 = vpop.f32.mrf.mxu0
    %789 = vmatprep.mubr.bf16.mxu0 0
    %790 = vmatmul.mubr.bf16.gmra.mxu0 %v679
    %v791 = vpop.f32.mrf.mxu0
    %v792 = vadd.f32 0.0, %v791
    %v793 = vpop.f32.mrf.mxu0
    %v794 = vpop.f32.mrf.mxu0
    %v795 = vadd.f32 0.0, %v794
    %v796 = vpop.f32.mrf.mxu0
    %797 = vmatprep.mubr.bf16.mxu0 0
    %798 = vmatmul.mubr.bf16.gmra.mxu0 %v680
    %v799 = vpop.f32.mrf.mxu0
    %v800 = vadd.f32 0.0, %v799
    %v801 = vpop.f32.mrf.mxu0
    %v802 = vpop.f32.mrf.mxu0
    %v803 = vadd.f32 0.0, %v802
    %v804 = vpop.f32.mrf.mxu0
    %805 = vmatprep.mubr.bf16.mxu0 0
    %806 = vmatmul.mubr.bf16.gmra.mxu0 %v681
    %v807 = vpop.f32.mrf.mxu0
    %v808 = vadd.f32 0.0, %v807
    %v809 = vpop.f32.mrf.mxu0
    %v810 = vpop.f32.mrf.mxu0
    %v811 = vadd.f32 0.0, %v810
    %v812 = vpop.f32.mrf.mxu0
    %813 = vmatprep.mubr.bf16.mxu0 0
    %814 = vmatmul.mubr.bf16.gmra.mxu0 %v682
    %v815 = vpop.f32.mrf.mxu0
    %v816 = vadd.f32 0.0, %v815
    %v817 = vpop.f32.mrf.mxu0
    %v818 = vpop.f32.mrf.mxu0
    %v819 = vadd.f32 0.0, %v818
    %v820 = vpop.f32.mrf.mxu0
    %821 = vmatprep.mubr.bf16.mxu0 0
    %822 = vmatmul.mubr.bf16.gmra.mxu0 %v683
    %v823 = vpop.f32.mrf.mxu0
    %v824 = vadd.f32 0.0, %v823
    %v825 = vpop.f32.mrf.mxu0
    %v826 = vpop.f32.mrf.mxu0
    %v827 = vadd.f32 0.0, %v826
    %v828 = vpop.f32.mrf.mxu0
    %829 = vmatprep.mubr.bf16.mxu0 0
    %830 = vmatmul.mubr.bf16.gmra.mxu0 %v684
    %v831 = vpop.f32.mrf.mxu0
    %v832 = vadd.f32 0.0, %v831
    %v833 = vpop.f32.mrf.mxu0
    %v834 = vpop.f32.mrf.mxu0
    %v835 = vadd.f32 0.0, %v834
    %v836 = vpop.f32.mrf.mxu0
    %837 = vdwg.mxu0
    %s838 = sld [smem:[#allocation2]]
    %v839 = vstv %s838
    %v840 = vadd.f32 %v776, %v839
    %v841 = vadd.f32 %v779, %v839
    %v842 = vadd.f32 %v784, %v839
    %v843 = vadd.f32 %v787, %v839
    %v844 = vadd.f32 %v792, %v839
    %v845 = vadd.f32 %v795, %v839
    %v846 = vadd.f32 %v800, %v839
    %v847 = vadd.f32 %v803, %v839
    %v848 = vadd.f32 %v808, %v839
    %v849 = vadd.f32 %v811, %v839
    %v850 = vadd.f32 %v816, %v839
    %v851 = vadd.f32 %v819, %v839
    %v852 = vadd.f32 %v824, %v839
    %v853 = vadd.f32 %v827, %v839
    %v854 = vadd.f32 %v832, %v839
    %v855 = vadd.f32 %v835, %v839
    %v856 = vld [vmem:[%s1] sm:$0xff]
    %v857 = vld [vmem:[%s1 + $0x8] sm:$0xff]
    %v858 = vld [vmem:[%s1 + $0x10] sm:$0xff]
    %v859 = vld [vmem:[%s1 + $0x18] sm:$0xff]
    %v860 = vld [vmem:[%s1 + $0x20] sm:$0xff]
    %v861 = vld [vmem:[%s1 + $0x28] sm:$0xff]
    %v862 = vld [vmem:[%s1 + $0x30] sm:$0xff]
    %v863 = vld [vmem:[%s1 + $0x38] sm:$0xff]
    %v864 = vld [vmem:[%s1 + $0x40] sm:$0xff]
    %v865 = vld [vmem:[%s1 + $0x48] sm:$0xff]
    %v866 = vld [vmem:[%s1 + $0x50] sm:$0xff]
    %v867 = vld [vmem:[%s1 + $0x58] sm:$0xff]
    %v868 = vld [vmem:[%s1 + $0x60] sm:$0xff]
    %v869 = vld [vmem:[%s1 + $0x68] sm:$0xff]
    %v870 = vld [vmem:[%s1 + $0x70] sm:$0xff]
    %v871 = vld [vmem:[%s1 + $0x78] sm:$0xff]
    %v872 = vadd.f32 %v840, %v856
    %v873 = vadd.f32 %v841, %v857
    %v874 = vadd.f32 %v842, %v858
    %v875 = vadd.f32 %v843, %v859
    %v876 = vadd.f32 %v844, %v860
    %v877 = vadd.f32 %v845, %v861
    %v878 = vadd.f32 %v846, %v862
    %v879 = vadd.f32 %v847, %v863
    %v880 = vadd.f32 %v848, %v864
    %v881 = vadd.f32 %v849, %v865
    %v882 = vadd.f32 %v850, %v866
    %v883 = vadd.f32 %v851, %v867
    %v884 = vadd.f32 %v852, %v868
    %v885 = vadd.f32 %v853, %v869
    %v886 = vadd.f32 %v854, %v870
    %v887 = vadd.f32 %v855, %v871
    %vm888 = vcmask 7168
    %v889 = vsel %vm888, %v872, -inf
    %v890 = vrot.slane %v889, 4
    %v891 = vmax.f32 %v889, %v890
    %v892 = vrot.slane %v891, 2
    %v893 = vmax.f32 %v891, %v892
    %v894 = vrot.slane %v893, 1
    %v895 = vmax.f32 %v893, %v894
    %v896 = vsel %vm888, %v873, -inf
    %v897 = vrot.slane %v896, 4
    %v898 = vmax.f32 %v896, %v897
    %v899 = vrot.slane %v898, 2
    %v900 = vmax.f32 %v898, %v899
    %v901 = vrot.slane %v900, 1
    %v902 = vmax.f32 %v900, %v901
    %v903 = vsel %vm888, %v874, -inf
    %v904 = vrot.slane %v903, 4
    %v905 = vmax.f32 %v903, %v904
    %v906 = vrot.slane %v905, 2
    %v907 = vmax.f32 %v905, %v906
    %v908 = vrot.slane %v907, 1
    %v909 = vmax.f32 %v907, %v908
    %v910 = vsel %vm888, %v875, -inf
    %v911 = vrot.slane %v910, 4
    %v912 = vmax.f32 %v910, %v911
    %v913 = vrot.slane %v912, 2
    %v914 = vmax.f32 %v912, %v913
    %v915 = vrot.slane %v914, 1
    %v916 = vmax.f32 %v914, %v915
    %v917 = vsel %vm888, %v876, -inf
    %v918 = vrot.slane %v917, 4
    %v919 = vmax.f32 %v917, %v918
    %v920 = vrot.slane %v919, 2
    %v921 = vmax.f32 %v919, %v920
    %v922 = vrot.slane %v921, 1
    %v923 = vmax.f32 %v921, %v922
    %v924 = vsel %vm888, %v877, -inf
    %v925 = vrot.slane %v924, 4
    %v926 = vmax.f32 %v924, %v925
    %v927 = vrot.slane %v926, 2
    %v928 = vmax.f32 %v926, %v927
    %v929 = vrot.slane %v928, 1
    %v930 = vmax.f32 %v928, %v929
    %v931 = vsel %vm888, %v878, -inf
    %v932 = vrot.slane %v931, 4
    %v933 = vmax.f32 %v931, %v932
    %v934 = vrot.slane %v933, 2
    %v935 = vmax.f32 %v933, %v934
    %v936 = vrot.slane %v935, 1
    %v937 = vmax.f32 %v935, %v936
    %v938 = vsel %vm888, %v879, -inf
    %v939 = vrot.slane %v938, 4
    %v940 = vmax.f32 %v938, %v939
    %v941 = vrot.slane %v940, 2
    %v942 = vmax.f32 %v940, %v941
    %v943 = vrot.slane %v942, 1
    %v944 = vmax.f32 %v942, %v943
    %v945 = vsel %vm888, %v880, -inf
    %v946 = vrot.slane %v945, 4
    %v947 = vmax.f32 %v945, %v946
    %v948 = vrot.slane %v947, 2
    %v949 = vmax.f32 %v947, %v948
    %v950 = vrot.slane %v949, 1
    %v951 = vmax.f32 %v949, %v950
    %v952 = vsel %vm888, %v881, -inf
    %v953 = vrot.slane %v952, 4
    %v954 = vmax.f32 %v952, %v953
    %v955 = vrot.slane %v954, 2
    %v956 = vmax.f32 %v954, %v955
    %v957 = vrot.slane %v956, 1
    %v958 = vmax.f32 %v956, %v957
    %v959 = vsel %vm888, %v882, -inf
    %v960 = vrot.slane %v959, 4
    %v961 = vmax.f32 %v959, %v960
    %v962 = vrot.slane %v961, 2
    %v963 = vmax.f32 %v961, %v962
    %v964 = vrot.slane %v963, 1
    %v965 = vmax.f32 %v963, %v964
    %v966 = vsel %vm888, %v883, -inf
    %v967 = vrot.slane %v966, 4
    %v968 = vmax.f32 %v966, %v967
    %v969 = vrot.slane %v968, 2
    %v970 = vmax.f32 %v968, %v969
    %v971 = vrot.slane %v970, 1
    %v972 = vmax.f32 %v970, %v971
    %v973 = vsel %vm888, %v884, -inf
    %v974 = vrot.slane %v973, 4
    %v975 = vmax.f32 %v973, %v974
    %v976 = vrot.slane %v975, 2
    %v977 = vmax.f32 %v975, %v976
    %v978 = vrot.slane %v977, 1
    %v979 = vmax.f32 %v977, %v978
    %v980 = vsel %vm888, %v885, -inf
    %v981 = vrot.slane %v980, 4
    %v982 = vmax.f32 %v980, %v981
    %v983 = vrot.slane %v982, 2
    %v984 = vmax.f32 %v982, %v983
    %v985 = vrot.slane %v984, 1
    %v986 = vmax.f32 %v984, %v985
    %v987 = vsel %vm888, %v886, -inf
    %v988 = vrot.slane %v987, 4
    %v989 = vmax.f32 %v987, %v988
    %v990 = vrot.slane %v989, 2
    %v991 = vmax.f32 %v989, %v990
    %v992 = vrot.slane %v991, 1
    %v993 = vmax.f32 %v991, %v992
    %v994 = vsel %vm888, %v887, -inf
    %v995 = vrot.slane %v994, 4
    %v996 = vmax.f32 %v994, %v995
    %v997 = vrot.slane %v996, 2
    %v998 = vmax.f32 %v996, %v997
    %v999 = vrot.slane %v998, 1
    %v1000 = vmax.f32 %v998, %v999
    %v1001 = vsub.f32 %v872, %v895
    %v1002 = vsub.f32 %v873, %v902
    %v1003 = vsub.f32 %v874, %v909
    %v1004 = vsub.f32 %v875, %v916
    %v1005 = vsub.f32 %v876, %v923
    %v1006 = vsub.f32 %v877, %v930
    %v1007 = vsub.f32 %v878, %v937
    %v1008 = vsub.f32 %v879, %v944
    %v1009 = vsub.f32 %v880, %v951
    %v1010 = vsub.f32 %v881, %v958
    %v1011 = vsub.f32 %v882, %v965
    %v1012 = vsub.f32 %v883, %v972
    %v1013 = vsub.f32 %v884, %v979
    %v1014 = vsub.f32 %v885, %v986
    %v1015 = vsub.f32 %v886, %v993
    %v1016 = vsub.f32 %v887, %v1000
    %v1017 = vmul.f32 %v1001, 1.442695
    %v1018 = vpow.pop %v1017
    %v1019 = vmul.f32 %v1002, 1.442695
    %v1020 = vpow.pop %v1019
    %v1021 = vmul.f32 %v1003, 1.442695
    %v1022 = vpow.pop %v1021
    %v1023 = vmul.f32 %v1004, 1.442695
    %v1024 = vpow.pop %v1023
    %v1025 = vmul.f32 %v1005, 1.442695
    %v1026 = vpow.pop %v1025
    %v1027 = vmul.f32 %v1006, 1.442695
    %v1028 = vpow.pop %v1027
    %v1029 = vmul.f32 %v1007, 1.442695
    %v1030 = vpow.pop %v1029
    %v1031 = vmul.f32 %v1008, 1.442695
    %v1032 = vpow.pop %v1031
    %v1033 = vmul.f32 %v1009, 1.442695
    %v1034 = vpow.pop %v1033
    %v1035 = vmul.f32 %v1010, 1.442695
    %v1036 = vpow.pop %v1035
    %v1037 = vmul.f32 %v1011, 1.442695
    %v1038 = vpow.pop %v1037
    %v1039 = vmul.f32 %v1012, 1.442695
    %v1040 = vpow.pop %v1039
    %v1041 = vmul.f32 %v1013, 1.442695
    %v1042 = vpow.pop %v1041
    %v1043 = vmul.f32 %v1014, 1.442695
    %v1044 = vpow.pop %v1043
    %v1045 = vmul.f32 %v1015, 1.442695
    %v1046 = vpow.pop %v1045
    %v1047 = vmul.f32 %v1016, 1.442695
    %v1048 = vpow.pop %v1047
    %v1049 = vsel %vm888, %v1018, 0.0
    %v1050 = vrot.slane %v1049, 4
    %v1051 = vadd.f32 %v1049, %v1050
    %v1052 = vrot.slane %v1051, 2
    %v1053 = vadd.f32 %v1051, %v1052
    %v1054 = vrot.slane %v1053, 1
    %v1055 = vadd.f32 %v1053, %v1054
    %v1056 = vsel %vm888, %v1020, 0.0
    %v1057 = vrot.slane %v1056, 4
    %v1058 = vadd.f32 %v1056, %v1057
    %v1059 = vrot.slane %v1058, 2
    %v1060 = vadd.f32 %v1058, %v1059
    %v1061 = vrot.slane %v1060, 1
    %v1062 = vadd.f32 %v1060, %v1061
    %v1063 = vsel %vm888, %v1022, 0.0
    %v1064 = vrot.slane %v1063, 4
    %v1065 = vadd.f32 %v1063, %v1064
    %v1066 = vrot.slane %v1065, 2
    %v1067 = vadd.f32 %v1065, %v1066
    %v1068 = vrot.slane %v1067, 1
    %v1069 = vadd.f32 %v1067, %v1068
    %v1070 = vsel %vm888, %v1024, 0.0
    %v1071 = vrot.slane %v1070, 4
    %v1072 = vadd.f32 %v1070, %v1071
    %v1073 = vrot.slane %v1072, 2
    %v1074 = vadd.f32 %v1072, %v1073
    %v1075 = vrot.slane %v1074, 1
    %v1076 = vadd.f32 %v1074, %v1075
    %v1077 = vsel %vm888, %v1026, 0.0
    %v1078 = vrot.slane %v1077, 4
    %v1079 = vadd.f32 %v1077, %v1078
    %v1080 = vrot.slane %v1079, 2
    %v1081 = vadd.f32 %v1079, %v1080
    %v1082 = vrot.slane %v1081, 1
    %v1083 = vadd.f32 %v1081, %v1082
    %v1084 = vsel %vm888, %v1028, 0.0
    %v1085 = vrot.slane %v1084, 4
    %v1086 = vadd.f32 %v1084, %v1085
    %v1087 = vrot.slane %v1086, 2
    %v1088 = vadd.f32 %v1086, %v1087
    %v1089 = vrot.slane %v1088, 1
    %v1090 = vadd.f32 %v1088, %v1089
    %v1091 = vsel %vm888, %v1030, 0.0
    %v1092 = vrot.slane %v1091, 4
    %v1093 = vadd.f32 %v1091, %v1092
    %v1094 = vrot.slane %v1093, 2
    %v1095 = vadd.f32 %v1093, %v1094
    %v1096 = vrot.slane %v1095, 1
    %v1097 = vadd.f32 %v1095, %v1096
    %v1098 = vsel %vm888, %v1032, 0.0
    %v1099 = vrot.slane %v1098, 4
    %v1100 = vadd.f32 %v1098, %v1099
    %v1101 = vrot.slane %v1100, 2
    %v1102 = vadd.f32 %v1100, %v1101
    %v1103 = vrot.slane %v1102, 1
    %v1104 = vadd.f32 %v1102, %v1103
    %v1105 = vsel %vm888, %v1034, 0.0
    %v1106 = vrot.slane %v1105, 4
    %v1107 = vadd.f32 %v1105, %v1106
    %v1108 = vrot.slane %v1107, 2
    %v1109 = vadd.f32 %v1107, %v1108
    %v1110 = vrot.slane %v1109, 1
    %v1111 = vadd.f32 %v1109, %v1110
    %v1112 = vsel %vm888, %v1036, 0.0
    %v1113 = vrot.slane %v1112, 4
    %v1114 = vadd.f32 %v1112, %v1113
    %v1115 = vrot.slane %v1114, 2
    %v1116 = vadd.f32 %v1114, %v1115
    %v1117 = vrot.slane %v1116, 1
    %v1118 = vadd.f32 %v1116, %v1117
    %v1119 = vsel %vm888, %v1038, 0.0
    %v1120 = vrot.slane %v1119, 4
    %v1121 = vadd.f32 %v1119, %v1120
    %v1122 = vrot.slane %v1121, 2
    %v1123 = vadd.f32 %v1121, %v1122
    %v1124 = vrot.slane %v1123, 1
    %v1125 = vadd.f32 %v1123, %v1124
    %v1126 = vsel %vm888, %v1040, 0.0
    %v1127 = vrot.slane %v1126, 4
    %v1128 = vadd.f32 %v1126, %v1127
    %v1129 = vrot.slane %v1128, 2
    %v1130 = vadd.f32 %v1128, %v1129
    %v1131 = vrot.slane %v1130, 1
    %v1132 = vadd.f32 %v1130, %v1131
    %v1133 = vsel %vm888, %v1042, 0.0
    %v1134 = vrot.slane %v1133, 4
    %v1135 = vadd.f32 %v1133, %v1134
    %v1136 = vrot.slane %v1135, 2
    %v1137 = vadd.f32 %v1135, %v1136
    %v1138 = vrot.slane %v1137, 1
    %v1139 = vadd.f32 %v1137, %v1138
    %v1140 = vsel %vm888, %v1044, 0.0
    %v1141 = vrot.slane %v1140, 4
    %v1142 = vadd.f32 %v1140, %v1141
    %v1143 = vrot.slane %v1142, 2
    %v1144 = vadd.f32 %v1142, %v1143
    %v1145 = vrot.slane %v1144, 1
    %v1146 = vadd.f32 %v1144, %v1145
    %v1147 = vsel %vm888, %v1046, 0.0
    %v1148 = vrot.slane %v1147, 4
    %v1149 = vadd.f32 %v1147, %v1148
    %v1150 = vrot.slane %v1149, 2
    %v1151 = vadd.f32 %v1149, %v1150
    %v1152 = vrot.slane %v1151, 1
    %v1153 = vadd.f32 %v1151, %v1152
    %v1154 = vsel %vm888, %v1048, 0.0
    %v1155 = vrot.slane %v1154, 4
    %v1156 = vadd.f32 %v1154, %v1155
    %v1157 = vrot.slane %v1156, 2
    %v1158 = vadd.f32 %v1156, %v1157
    %v1159 = vrot.slane %v1158, 1
    %v1160 = vadd.f32 %v1158, %v1159
    %v1161 = vrcp.pop %v1055
    %v1162 = vrcp.pop %v1062
    %v1163 = vrcp.pop %v1069
    %v1164 = vrcp.pop %v1076
    %v1165 = vrcp.pop %v1083
    %v1166 = vrcp.pop %v1090
    %v1167 = vrcp.pop %v1097
    %v1168 = vrcp.pop %v1104
    %v1169 = vrcp.pop %v1111
    %v1170 = vrcp.pop %v1118
    %v1171 = vrcp.pop %v1125
    %v1172 = vrcp.pop %v1132
    %v1173 = vrcp.pop %v1139
    %v1174 = vrcp.pop %v1146
    %v1175 = vrcp.pop %v1153
    %v1176 = vrcp.pop %v1160
    %v1177 = vmul.f32 %v1018, %v1161
    %v1178 = vmul.f32 %v1020, %v1162
    %v1179 = vmul.f32 %v1022, %v1163
    %v1180 = vmul.f32 %v1024, %v1164
    %v1181 = vmul.f32 %v1026, %v1165
    %v1182 = vmul.f32 %v1028, %v1166
    %v1183 = vmul.f32 %v1030, %v1167
    %v1184 = vmul.f32 %v1032, %v1168
    %v1185 = vmul.f32 %v1034, %v1169
    %v1186 = vmul.f32 %v1036, %v1170
    %v1187 = vmul.f32 %v1038, %v1171
    %v1188 = vmul.f32 %v1040, %v1172
    %v1189 = vmul.f32 %v1042, %v1173
    %v1190 = vmul.f32 %v1044, %v1174
    %v1191 = vmul.f32 %v1046, %v1175
    %v1192 = vmul.f32 %v1048, %v1176
    %v1193 = vunpack.c.l.bf16 %v49
    %v1194 = vunpack.c.l.bf16 %v50
    %v1195 = vunpack.c.l.bf16 %v51
    %v1196 = vunpack.c.l.bf16 %v52
    %v1197 = vunpack.c.l.bf16 %v53
    %v1198 = vunpack.c.l.bf16 %v54
    %v1199 = vunpack.c.l.bf16 %v55
    %v1200 = vunpack.c.l.bf16 %v56
    %v1201 = vunpack.c.l.bf16 %v57
    %v1202 = vunpack.c.l.bf16 %v58
    %v1203 = vunpack.c.l.bf16 %v59
    %v1204 = vunpack.c.l.bf16 %v60
    %v1205 = vunpack.c.l.bf16 %v61
    %v1206 = vunpack.c.l.bf16 %v62
    %v1207 = vunpack.c.l.bf16 %v63
    %v1208 = vunpack.c.l.bf16 %v64
    %1210 = vset.pattern.permute.xlu0 0
    %1211 = vperm.xlu0 %1210, %v1177
    %v1212 = vpop.permute.xlu0 %1211
    %1215 = vset.pattern.permute.xlu0 0
    %1216 = vperm.xlu0 %1215, %v1178
    %v1217 = vpop.permute.xlu0 %1216
    %1220 = vset.pattern.permute.xlu0 0
    %1221 = vperm.xlu0 %1220, %v1179
    %v1222 = vpop.permute.xlu0 %1221
    %1225 = vset.pattern.permute.xlu0 0
    %1226 = vperm.xlu0 %1225, %v1180
    %v1227 = vpop.permute.xlu0 %1226
    %1230 = vset.pattern.permute.xlu0 0
    %1231 = vperm.xlu0 %1230, %v1181
    %v1232 = vpop.permute.xlu0 %1231
    %1235 = vset.pattern.permute.xlu0 0
    %1236 = vperm.xlu0 %1235, %v1182
    %v1237 = vpop.permute.xlu0 %1236
    %1240 = vset.pattern.permute.xlu0 0
    %1241 = vperm.xlu0 %1240, %v1183
    %v1242 = vpop.permute.xlu0 %1241
    %1245 = vset.pattern.permute.xlu0 0
    %1246 = vperm.xlu0 %1245, %v1184
    %v1247 = vpop.permute.xlu0 %1246
    %1250 = vset.pattern.permute.xlu0 0
    %1251 = vperm.xlu0 %1250, %v1185
    %v1252 = vpop.permute.xlu0 %1251
    %1255 = vset.pattern.permute.xlu0 0
    %1256 = vperm.xlu0 %1255, %v1186
    %v1257 = vpop.permute.xlu0 %1256
    %1260 = vset.pattern.permute.xlu0 0
    %1261 = vperm.xlu0 %1260, %v1187
    %v1262 = vpop.permute.xlu0 %1261
    %1265 = vset.pattern.permute.xlu0 0
    %1266 = vperm.xlu0 %1265, %v1188
    %v1267 = vpop.permute.xlu0 %1266
    %1270 = vset.pattern.permute.xlu0 0
    %1271 = vperm.xlu0 %1270, %v1189
    %v1272 = vpop.permute.xlu0 %1271
    %1275 = vset.pattern.permute.xlu0 0
    %1276 = vperm.xlu0 %1275, %v1190
    %v1277 = vpop.permute.xlu0 %1276
    %1280 = vset.pattern.permute.xlu0 0
    %1281 = vperm.xlu0 %1280, %v1191
    %v1282 = vpop.permute.xlu0 %1281
    %1285 = vset.pattern.permute.xlu0 0
    %1286 = vperm.xlu0 %1285, %v1192
    %v1287 = vpop.permute.xlu0 %1286
    %v1289 = vmul.f32 %v1212, %v1193
    %v1290 = vmul.f32 %v1217, %v1194
    %v1291 = vmul.f32 %v1222, %v1195
    %v1292 = vmul.f32 %v1227, %v1196
    %v1293 = vmul.f32 %v1232, %v1197
    %v1294 = vmul.f32 %v1237, %v1198
    %v1295 = vmul.f32 %v1242, %v1199
    %v1296 = vmul.f32 %v1247, %v1200
    %v1297 = vmul.f32 %v1252, %v1201
    %v1298 = vmul.f32 %v1257, %v1202
    %v1299 = vmul.f32 %v1262, %v1203
    %v1300 = vmul.f32 %v1267, %v1204
    %v1301 = vmul.f32 %v1272, %v1205
    %v1302 = vmul.f32 %v1277, %v1206
    %v1303 = vmul.f32 %v1282, %v1207
    %v1304 = vmul.f32 %v1287, %v1208
    %v1305 = vrot.slane %v1289, 4
    %v1306 = vadd.f32 %v1289, %v1305
    %v1307 = vrot.slane %v1306, 2
    %v1308 = vadd.f32 %v1306, %v1307
    %v1309 = vrot.slane %v1308, 1
    %v1310 = vadd.f32 %v1308, %v1309
    %v1311 = vrot.slane %v1290, 4
    %v1312 = vadd.f32 %v1290, %v1311
    %v1313 = vrot.slane %v1312, 2
    %v1314 = vadd.f32 %v1312, %v1313
    %v1315 = vrot.slane %v1314, 1
    %v1316 = vadd.f32 %v1314, %v1315
    %v1317 = vrot.slane %v1291, 4
    %v1318 = vadd.f32 %v1291, %v1317
    %v1319 = vrot.slane %v1318, 2
    %v1320 = vadd.f32 %v1318, %v1319
    %v1321 = vrot.slane %v1320, 1
    %v1322 = vadd.f32 %v1320, %v1321
    %v1323 = vrot.slane %v1292, 4
    %v1324 = vadd.f32 %v1292, %v1323
    %v1325 = vrot.slane %v1324, 2
    %v1326 = vadd.f32 %v1324, %v1325
    %v1327 = vrot.slane %v1326, 1
    %v1328 = vadd.f32 %v1326, %v1327
    %v1329 = vrot.slane %v1293, 4
    %v1330 = vadd.f32 %v1293, %v1329
    %v1331 = vrot.slane %v1330, 2
    %v1332 = vadd.f32 %v1330, %v1331
    %v1333 = vrot.slane %v1332, 1
    %v1334 = vadd.f32 %v1332, %v1333
    %v1335 = vrot.slane %v1294, 4
    %v1336 = vadd.f32 %v1294, %v1335
    %v1337 = vrot.slane %v1336, 2
    %v1338 = vadd.f32 %v1336, %v1337
    %v1339 = vrot.slane %v1338, 1
    %v1340 = vadd.f32 %v1338, %v1339
    %v1341 = vrot.slane %v1295, 4
    %v1342 = vadd.f32 %v1295, %v1341
    %v1343 = vrot.slane %v1342, 2
    %v1344 = vadd.f32 %v1342, %v1343
    %v1345 = vrot.slane %v1344, 1
    %v1346 = vadd.f32 %v1344, %v1345
    %v1347 = vrot.slane %v1296, 4
    %v1348 = vadd.f32 %v1296, %v1347
    %v1349 = vrot.slane %v1348, 2
    %v1350 = vadd.f32 %v1348, %v1349
    %v1351 = vrot.slane %v1350, 1
    %v1352 = vadd.f32 %v1350, %v1351
    %v1353 = vrot.slane %v1297, 4
    %v1354 = vadd.f32 %v1297, %v1353
    %v1355 = vrot.slane %v1354, 2
    %v1356 = vadd.f32 %v1354, %v1355
    %v1357 = vrot.slane %v1356, 1
    %v1358 = vadd.f32 %v1356, %v1357
    %v1359 = vrot.slane %v1298, 4
    %v1360 = vadd.f32 %v1298, %v1359
    %v1361 = vrot.slane %v1360, 2
    %v1362 = vadd.f32 %v1360, %v1361
    %v1363 = vrot.slane %v1362, 1
    %v1364 = vadd.f32 %v1362, %v1363
    %v1365 = vrot.slane %v1299, 4
    %v1366 = vadd.f32 %v1299, %v1365
    %v1367 = vrot.slane %v1366, 2
    %v1368 = vadd.f32 %v1366, %v1367
    %v1369 = vrot.slane %v1368, 1
    %v1370 = vadd.f32 %v1368, %v1369
    %v1371 = vrot.slane %v1300, 4
    %v1372 = vadd.f32 %v1300, %v1371
    %v1373 = vrot.slane %v1372, 2
    %v1374 = vadd.f32 %v1372, %v1373
    %v1375 = vrot.slane %v1374, 1
    %v1376 = vadd.f32 %v1374, %v1375
    %v1377 = vrot.slane %v1301, 4
    %v1378 = vadd.f32 %v1301, %v1377
    %v1379 = vrot.slane %v1378, 2
    %v1380 = vadd.f32 %v1378, %v1379
    %v1381 = vrot.slane %v1380, 1
    %v1382 = vadd.f32 %v1380, %v1381
    %v1383 = vrot.slane %v1302, 4
    %v1384 = vadd.f32 %v1302, %v1383
    %v1385 = vrot.slane %v1384, 2
    %v1386 = vadd.f32 %v1384, %v1385
    %v1387 = vrot.slane %v1386, 1
    %v1388 = vadd.f32 %v1386, %v1387
    %v1389 = vrot.slane %v1303, 4
    %v1390 = vadd.f32 %v1303, %v1389
    %v1391 = vrot.slane %v1390, 2
    %v1392 = vadd.f32 %v1390, %v1391
    %v1393 = vrot.slane %v1392, 1
    %v1394 = vadd.f32 %v1392, %v1393
    %v1395 = vrot.slane %v1304, 4
    %v1396 = vadd.f32 %v1304, %v1395
    %v1397 = vrot.slane %v1396, 2
    %v1398 = vadd.f32 %v1396, %v1397
    %v1399 = vrot.slane %v1398, 1
    %v1400 = vadd.f32 %v1398, %v1399
    %vm1417 = vcmask 1041409
    %v1418 = vsel %vm1417, %v1316, %v1310
    %vm1419 = vcmask 1042434
    %v1420 = vsel %vm1419, %v1322, %v1418
    %vm1421 = vcmask 1043459
    %v1422 = vsel %vm1421, %v1328, %v1420
    %vm1423 = vcmask 1044484
    %v1424 = vsel %vm1423, %v1334, %v1422
    %vm1425 = vcmask 1045509
    %v1426 = vsel %vm1425, %v1340, %v1424
    %vm1427 = vcmask 1046534
    %v1428 = vsel %vm1427, %v1346, %v1426
    %vm1429 = vcmask 1047559
    %v1430 = vsel %vm1429, %v1352, %v1428
    %v1431 = vsel %vm1417, %v1364, %v1358
    %v1432 = vsel %vm1419, %v1370, %v1431
    %v1433 = vsel %vm1421, %v1376, %v1432
    %v1434 = vsel %vm1423, %v1382, %v1433
    %v1435 = vsel %vm1425, %v1388, %v1434
    %v1436 = vsel %vm1427, %v1394, %v1435
    %v1437 = vsel %vm1429, %v1400, %v1436
    %1440 = vst [vmem:[#allocation6] sm:$0xff] %v1430
    %1441 = vst [vmem:[#allocation6 + $0x8] sm:$0xff] %v1437
    // Predicated region
    $region42: #{tpu_custom_call.1} parent=1 // pred_check
      _
    $region43: #{tpu_custom_call.1} parent=1 // pred_check_branch
      %1443 = sbr.rel (0) target = $region45
    $region44: #{tpu_custom_call.1} parent=1 // pred_region
      %s1445 = ssub.s32 256, 256
      %1446 = vsyncadd [#allocation5], %s1445
      %s1447 = sshll.u32 [#allocation6], 4
      %s1448 = int_to_ptr.vmem [resolvable:$true] %s1447
      %1453 = dma.vmem_to_hbm [thread:$0]  %s1448, 256, %s9, [#allocation5], 128, 128, 8
    $region45: #{tpu_custom_call.1} parent=1 // pred_fallthru
      _
    // Predicated region
    $region46: #{tpu_custom_call.1} parent=1 // pred_check
      _
    $region47: #{tpu_custom_call.1} parent=1 // pred_check_branch
      %1455 = sbr.rel (0) target = $region49
    $region48: #{tpu_custom_call.1} parent=1 // pred_region
      %1456 = dma.done [#allocation5], 256
    $region49: #{tpu_custom_call.1} parent=1 // pred_fallthru
      _
    %1457 = vsyncpa [#allocation4], 1
    %1458 = vsyncpa [#allocation5], 1

</llo_original>
